<compile_context>
chip_gen: v5e
topology: v5e:2x2
jax: 0.10.0
libtpu: 0.0.40
codegen_flags: <defaults>
</compile_context>

<pallas_src>
import numpy as np
import jax
import jax.numpy as jnp
from jax.experimental import pallas as pl
from jax.experimental.pallas import tpu as pltpu


# --------------------------------------------------------------------------
# Pallas kernels  (channels on sublanes, flattened spatial on lanes)
# --------------------------------------------------------------------------
def _attn_kernel(patch_ref, g_ref, wt_ref, wphi_ref, bphi_ref,
                 wpsi_ref, bpsi_ref, out_ref):
    """Both attention branches fused, at sub-sampled resolution.
       out[k, :] = sigmoid(psi_k(relu(theta_k(x) + phi_k(g))))   k in {0,1}."""
    theta = jnp.dot(wt_ref[...], patch_ref[...],
                    preferred_element_type=jnp.float32)                 # (2*inter, t)
    phi = jnp.dot(wphi_ref[...], g_ref[...],
                  preferred_element_type=jnp.float32) + bphi_ref[...]
    f = jnp.maximum(theta + phi, 0.0)                                   # f32
    psi = jnp.dot(wpsi_ref[...], f,
                  preferred_element_type=jnp.float32) + bpsi_ref[...]   # (2, t)
    out_ref[...] = jax.nn.sigmoid(psi)


def _output_kernel(x_ref, att_ref, a1_ref, a2_ref, b_ref, out_ref):
    """Fused gates + combine (all BatchNorms and both 1x1-conv chains folded):
       out = relu(A1 @ (att1 * x) + A2 @ (att2 * x) + b).
       Blocks carry a leading size-1 batch dim; everything is f32 (no cast
       copies, exact fold; K=4 so the MXU cost is negligible)."""
    x = x_ref[0]                               # (Cin, tile) f32
    att = att_ref[0]                           # (2,   tile) f32
    y = (jnp.dot(a1_ref[...], x * att[0:1, :], preferred_element_type=jnp.float32)
         + jnp.dot(a2_ref[...], x * att[1:2, :], preferred_element_type=jnp.float32)
         + b_ref[...])
    out_ref[0] = jnp.maximum(y, 0.0)


# --------------------------------------------------------------------------
# Helpers
# --------------------------------------------------------------------------
_MAX_TILE = 16384                 # lanes per grid step (sweep 16K-32K per review)
_MIN_SPLIT = 4096                 # only force >=2 spatial steps above this extent
_VMEM_LIMIT = 32 * 1024 * 1024    # safe on v7x (64 MiB phys / 32 MiB scoped)


def _compiler_params(grid_rank):
    return pltpu.CompilerParams(
        dimension_semantics=("parallel",) * grid_rank,   # megacore sharding (v7x)
        vmem_limit_bytes=_VMEM_LIMIT)


def _round_up(x, m):
    return (x + m - 1) // m * m


def _cdiv(a, b):
    return (a + b - 1) // b


def _choose_tile(n, max_tile=_MAX_TILE):
    """Largest 128-multiple tile <= max_tile.  If a large extent would collapse
    to a single grid step, split into >=2 so the 'parallel' axis can shard
    across both TensorCores on v7x."""
    t = min(max_tile, _round_up(n, 128))
    if n >= _MIN_SPLIT and _cdiv(n, t) < 2:
        t = _round_up(_cdiv(n, 2), 128)
    return t


def _const_spec(shape):
    nd = len(shape)
    return pl.BlockSpec(shape, lambda *_: (0,) * nd)


def _bilinear_matrix(out_size, in_size):
    """PyTorch bilinear interpolation (align_corners=False) as a dense matrix."""
    scale = in_size / out_size
    m = np.zeros((out_size, in_size), dtype=np.float32)
    for o in range(out_size):
        src = (o + 0.5) * scale - 0.5
        src = max(src, 0.0)
        i0 = min(int(np.floor(src)), in_size - 1)
        i1 = min(i0 + 1, in_size - 1)
        lam = src - i0
        m[o, i0] += 1.0 - lam
        m[o, i1] += lam
    return m


# --------------------------------------------------------------------------
# pallas_call wrappers
# --------------------------------------------------------------------------
def attention_stage(patches_T, g_T, q):
    """Fused both-branch attention at sub-sampled resolution. (2, Ns) f32."""
    kc, n = patches_T.shape
    cg = g_T.shape[0]
    tile = _choose_tile(n)
    weights = [q['theta_w'], q['phi_w'], q['phi_b'], q['psi_w'], q['psi_b']]
    in_specs = [pl.BlockSpec((kc, tile), lambda i: (0, i)),
                pl.BlockSpec((cg, tile), lambda i: (0, i))]
    in_specs += [_const_spec(w.shape) for w in weights]
    return pl.pallas_call(
        _attn_kernel,
        out_shape=jax.ShapeDtypeStruct((2, n), jnp.float32),
        grid=(_cdiv(n, tile),),
        in_specs=in_specs,
        out_specs=pl.BlockSpec((2, tile), lambda i: (0, i)),
        compiler_params=_compiler_params(1),
    )(patches_T, g_T, *weights)


def output_stage(x_b, att_b, q):
    """Fused gates + combine over (B, Cin, H*W) — batch is a grid axis, so no
    wrapper transpose/pad/cast of x-sized data ever touches HBM."""
    B, cin, n = x_b.shape
    tile = _choose_tile(n)
    weights = [q['A1'], q['A2'], q['b']]
    in_specs = [pl.BlockSpec((1, cin, tile), lambda b, i: (b, 0, i)),
                pl.BlockSpec((1, 2, tile), lambda b, i: (b, 0, i))]
    in_specs += [_const_spec(w.shape) for w in weights]
    return pl.pallas_call(
        _output_kernel,
        out_shape=jax.ShapeDtypeStruct((B, cin, n), jnp.float32),
        grid=(B, _cdiv(n, tile)),
        in_specs=in_specs,
        out_specs=pl.BlockSpec((1, cin, tile), lambda b, i: (b, 0, i)),
        compiler_params=_compiler_params(2),
    )(x_b, att_b, *weights)


# --------------------------------------------------------------------------
# Parameter init (deterministic, synthetic) + one-time fold/fuse
# --------------------------------------------------------------------------
def init_params(key, in_size, gate_size, inter_size, kH, kW):
    """Synthetic per-branch parameters structured like the PyTorch module
    (eval-mode BatchNorm running statistics)."""
    keys = iter(jax.random.split(key, 64))

    def nrm(shape, scale=0.2):
        return scale * jax.random.normal(next(keys), shape, dtype=jnp.float32)

    def bn(c):
        gamma = 1.0 + 0.1 * jax.random.normal(next(keys), (c, 1), dtype=jnp.float32)
        beta = 0.1 * jax.random.normal(next(keys), (c, 1), dtype=jnp.float32)
        mean = 0.1 * jax.random.normal(next(keys), (c, 1), dtype=jnp.float32)
        var = 1.0 + 0.1 * jnp.abs(jax.random.normal(next(keys), (c, 1), dtype=jnp.float32))
        return dict(gamma=gamma, beta=beta, mean=mean, var=var, eps=1e-5)

    p = {}
    for b in (1, 2):
        p[f'theta_w{b}'] = nrm((inter_size, in_size * kH * kW))   # strided conv as patch matmul
        p[f'phi_w{b}'] = nrm((inter_size, gate_size))             # 1x1 conv
        p[f'phi_b{b}'] = nrm((inter_size, 1))
        p[f'psi_w{b}'] = nrm((1, inter_size))                     # 1x1 conv -> 1 channel
        p[f'psi_b{b}'] = nrm((1, 1))
        p[f'W_w{b}'] = nrm((in_size, in_size))                    # W: 1x1 conv + BN
        p[f'W_b{b}'] = nrm((in_size, 1))
        p[f'W_bn{b}'] = bn(in_size)
    p['comb_w'] = nrm((in_size, 2 * in_size))                     # combine_gates conv
    p['comb_b'] = nrm((in_size, 1))
    p['comb_bn'] = bn(in_size)
    return p


def prepare_params(p, in_size, inter_size, compute_dtype=jnp.bfloat16):
    """One-time fold: stack the two branches, fold every BatchNorm into its 1x1
    conv, and collapse the (gate -> combine) linear chain.  Exact algebra for
    the eval-mode module.  Attention-stage weights go to `compute_dtype`
    (bf16 default — halves the dominant HBM stream); the folded output-stage
    A1/A2/b stay f32 for numeric parity (K is tiny)."""

    def bn_fold(bn):
        scale = bn['gamma'] / jnp.sqrt(bn['var'] + bn['eps'])
        shift = bn['beta'] - bn['mean'] * scale
        return scale, shift

    q = {}
    # --- attention stage: stack branch weights along the output-channel axis.
    q['theta_w'] = jnp.concatenate([p['theta_w1'], p['theta_w2']], 0).astype(compute_dtype)
    q['phi_w'] = jnp.concatenate([p['phi_w1'], p['phi_w2']], 0).astype(compute_dtype)
    q['phi_b'] = jnp.concatenate([p['phi_b1'], p['phi_b2']], 0)          # f32 (2*inter, 1)
    z = jnp.zeros((1, inter_size), jnp.float32)
    q['psi_w'] = jnp.concatenate(
        [jnp.concatenate([p['psi_w1'], z], 1),
         jnp.concatenate([z, p['psi_w2']], 1)], 0)                       # (2, 2*inter) block-diag
    q['psi_b'] = jnp.concatenate([p['psi_b1'], p['psi_b2']], 0)          # (2, 1)

    # --- output stage: fold BN into convs, then collapse W_i into combine.
    s1, t1 = bn_fold(p['W_bn1'])
    s2, t2 = bn_fold(p['W_bn2'])
    sc, tc = bn_fold(p['comb_bn'])
    W1 = s1 * p['W_w1']; b1 = s1 * p['W_b1'] + t1
    W2 = s2 * p['W_w2']; b2 = s2 * p['W_b2'] + t2
    Wc1 = sc * p['comb_w'][:, :in_size]
    Wc2 = sc * p['comb_w'][:, in_size:]
    bc = sc * p['comb_b'] + tc
    q['A1'] = Wc1 @ W1                                                   # f32 (Cin, Cin)
    q['A2'] = Wc2 @ W2                                                   # f32 (Cin, Cin)
    q['b'] = Wc1 @ b1 + Wc2 @ b2 + bc                                    # f32 (Cin, 1)
    return q


# --------------------------------------------------------------------------
# Forward (MultiAttentionBlock2D)
# --------------------------------------------------------------------------
def multi_attention_block_2d(x_nchw, g_nchw, params, sub_sample_factor=(2, 2)):
    B, Cin, H, W = x_nchw.shape
    _, Cg, Hg, Wg = g_nchw.shape
    kH, kW = sub_sample_factor
    Hs, Ws = H // kH, W // kW
    Ns = B * Hs * Ws
    compute_dtype = params['theta_w'].dtype

    # ---- theta's strided conv as a patch matmul, (Cin*kH*kW, B*Hs*Ws) layout.
    # (The bf16 cast fuses into this unavoidable transpose; no jnp.pad copies.)
    x5 = x_nchw.reshape(B, Cin, Hs, kH, Ws, kW)
    patches_T = (x5.transpose(1, 3, 5, 0, 2, 4)
                 .reshape(Cin * kH * kW, Ns).astype(compute_dtype))

    # upsample(phi(g)) == phi(upsample(g)) (bilinear weights sum to 1): resize g
    # to theta's spatial size; phi runs inside the kernel.  g is tiny.
    Ug_h = jnp.asarray(_bilinear_matrix(Hs, Hg))
    Ug_w = jnp.asarray(_bilinear_matrix(Ws, Wg))
    g_T = jnp.einsum('hp,bcpq,wq->cbhw', Ug_h, g_nchw, Ug_w
                     ).reshape(Cg, Ns).astype(compute_dtype)

    # ---- fused attention stage (both branches in one pallas_call)
    att_s = attention_stage(patches_T, g_T, params)                      # (2, Ns) f32
    att_s = att_s.reshape(2, B, Hs, Ws)

    # ---- one batched bilinear upsample for both attention maps (tiny data),
    #      produced directly in the (B, 2, H, W) layout the output kernel and
    #      the returned `att` both consume — no transpose, no bf16 cast.
    Uh = jnp.asarray(_bilinear_matrix(H, Hs))
    Uw = jnp.asarray(_bilinear_matrix(W, Ws))
    att = jnp.einsum('hp,kbpq,wq->bkhw', Uh, att_s, Uw)                  # (B,2,H,W) f32

    # ---- fused output stage: relu(A1@(a1*x) + A2@(a2*x) + b), batch on grid.
    # x/att are consumed as free reshapes of their native layouts (f32).
    out = output_stage(x_nchw.reshape(B, Cin, H * W),
                       att.reshape(B, 2, H * W), params)                 # (B,Cin,H*W) f32

    return out.reshape(B, Cin, H, W), att


# --------------------------------------------------------------------------
if __name__ == "__main__":
    key = jax.random.PRNGKey(0)
    k_x, k_g, k_p = jax.random.split(key, 3)

    B, in_size, gate_size, inter_size = 2, 4, 8, 4
    H, W = 16, 16
    sub = (2, 2)
    Hg, Wg = H // sub[0], W // sub[1]     # typical U-Net gating-signal resolution

    x = jax.random.normal(k_x, (B, in_size, H, W), dtype=jnp.float32)
    g = jax.random.normal(k_g, (B, gate_size, Hg, Wg), dtype=jnp.float32)

    raw = init_params(k_p, in_size, gate_size, inter_size, *sub)
    params = prepare_params(raw, in_size, inter_size, compute_dtype=jnp.bfloat16)

    fwd = jax.jit(lambda xx, gg: multi_attention_block_2d(xx, gg, params, sub))
    out, att = fwd(x, g)
    jax.block_until_ready((out, att))

    assert out.shape == (B, in_size, H, W), out.shape
    assert att.shape == (B, 2, H, W), att.shape
    assert out.dtype == jnp.float32 and att.dtype == jnp.float32
    assert bool(jnp.all(jnp.isfinite(out))) and bool(jnp.all(jnp.isfinite(att)))
    print("KERNEL_OK")
</pallas_src>

<mosaic_0001>
module attributes {stable_mosaic.version = 11 : i64} {
  func.func @_attn_kernel(%arg0: i32, %arg1: memref<16x128xbf16, #tpu.memory_space<vmem>>, %arg2: memref<8x128xbf16, #tpu.memory_space<vmem>>, %arg3: memref<8x16xbf16, #tpu.memory_space<vmem>>, %arg4: memref<8x8xbf16, #tpu.memory_space<vmem>>, %arg5: memref<8x1xf32, #tpu.memory_space<vmem>>, %arg6: memref<2x8xf32, #tpu.memory_space<vmem>>, %arg7: memref<2x1xf32, #tpu.memory_space<vmem>>, %arg8: memref<2x128xf32, #tpu.memory_space<vmem>>) attributes {dimension_semantics = [#tpu.dimension_semantics<parallel>], iteration_bounds = array<i64: 1>, scalar_prefetch = 0 : i64, scratch_operands = 0 : i64, tpu.core_type = #tpu.core_type<tc>, window_params = [{transform_indices = @transform_0, window_bounds = array<i64: 16, 128>}, {transform_indices = @transform_1, window_bounds = array<i64: 8, 128>}, {pipeline_mode = #tpu.pipeline_mode<synchronous>, transform_indices = @transform_2, window_bounds = array<i64: 8, 16>}, {pipeline_mode = #tpu.pipeline_mode<synchronous>, transform_indices = @transform_3, window_bounds = array<i64: 8, 8>}, {pipeline_mode = #tpu.pipeline_mode<synchronous>, transform_indices = @transform_4, window_bounds = array<i64: 8, 1>}, {pipeline_mode = #tpu.pipeline_mode<synchronous>, transform_indices = @transform_5, window_bounds = array<i64: 2, 8>}, {pipeline_mode = #tpu.pipeline_mode<synchronous>, transform_indices = @transform_6, window_bounds = array<i64: 2, 1>}, {transform_indices = @transform_7, window_bounds = array<i64: 2, 128>}]} {
    %c0 = arith.constant 0 : index
    %c0_0 = arith.constant 0 : index
    %0 = vector.load %arg3[%c0, %c0_0] : memref<8x16xbf16, #tpu.memory_space<vmem>>, vector<8x16xbf16>
    %c0_1 = arith.constant 0 : index
    %c0_2 = arith.constant 0 : index
    %1 = vector.load %arg1[%c0_1, %c0_2] : memref<16x128xbf16, #tpu.memory_space<vmem>>, vector<16x128xbf16>
    %cst = arith.constant dense<0.000000e+00> : vector<8x128xf32>
    %2 = tpu.matmul %0, %1, %cst {dimension_numbers = #tpu.dot_dimension_numbers<[1], [0], [0], [1], [0, 0, 1, 1], [], []>} : vector<8x16xbf16>, vector<16x128xbf16>, vector<8x128xf32> -> vector<8x128xf32>
    %c0_3 = arith.constant 0 : index
    %c0_4 = arith.constant 0 : index
    %3 = vector.load %arg4[%c0_3, %c0_4] : memref<8x8xbf16, #tpu.memory_space<vmem>>, vector<8x8xbf16>
    %c0_5 = arith.constant 0 : index
    %c0_6 = arith.constant 0 : index
    %4 = vector.load %arg2[%c0_5, %c0_6] : memref<8x128xbf16, #tpu.memory_space<vmem>>, vector<8x128xbf16>
    %cst_7 = arith.constant dense<0.000000e+00> : vector<8x128xf32>
    %5 = tpu.matmul %3, %4, %cst_7 {dimension_numbers = #tpu.dot_dimension_numbers<[1], [0], [0], [1], [0, 0, 1, 1], [], []>} : vector<8x8xbf16>, vector<8x128xbf16>, vector<8x128xf32> -> vector<8x128xf32>
    %c0_8 = arith.constant 0 : index
    %c0_9 = arith.constant 0 : index
    %6 = vector.load %arg5[%c0_8, %c0_9] : memref<8x1xf32, #tpu.memory_space<vmem>>, vector<8x1xf32>
    %7 = vector.broadcast %6 : vector<8x1xf32> to vector<8x128xf32>
    %8 = arith.addf %5, %7 : vector<8x128xf32>
    %9 = arith.addf %2, %8 : vector<8x128xf32>
    %cst_10 = arith.constant 0.000000e+00 : f32
    %10 = vector.broadcast %cst_10 : f32 to vector<8x128xf32>
    %11 = arith.maximumf %9, %10 : vector<8x128xf32>
    %c0_11 = arith.constant 0 : index
    %c0_12 = arith.constant 0 : index
    %12 = vector.load %arg6[%c0_11, %c0_12] : memref<2x8xf32, #tpu.memory_space<vmem>>, vector<2x8xf32>
    %cst_13 = arith.constant dense<0.000000e+00> : vector<2x128xf32>
    %13 = tpu.matmul %12, %11, %cst_13 {dimension_numbers = #tpu.dot_dimension_numbers<[1], [0], [0], [1], [0, 0, 1, 1], [], []>} : vector<2x8xf32>, vector<8x128xf32>, vector<2x128xf32> -> vector<2x128xf32>
    %c0_14 = arith.constant 0 : index
    %c0_15 = arith.constant 0 : index
    %14 = vector.load %arg7[%c0_14, %c0_15] : memref<2x1xf32, #tpu.memory_space<vmem>>, vector<2x1xf32>
    %15 = vector.broadcast %14 : vector<2x1xf32> to vector<2x128xf32>
    %16 = arith.addf %13, %15 : vector<2x128xf32>
    %17 = arith.negf %16 : vector<2x128xf32>
    %18 = math.exp %17 : vector<2x128xf32>
    %cst_16 = arith.constant 1.000000e+00 : f32
    %19 = vector.broadcast %cst_16 : f32 to vector<2x128xf32>
    %20 = arith.addf %19, %18 : vector<2x128xf32>
    %21 = arith.divf %19, %20 : vector<2x128xf32>
    %c0_17 = arith.constant 0 : index
    %c0_18 = arith.constant 0 : index
    %22 = vector.load %arg8[%c0_17, %c0_18] : memref<2x128xf32, #tpu.memory_space<vmem>>, vector<2x128xf32>
    tpu.vector_store %arg8[%c0_17, %c0_18], %21 {strides = array<i32>} : memref<2x128xf32, #tpu.memory_space<vmem>>, vector<2x128xf32>,
    return
  }
  func.func @transform_0(%arg0: i32) -> (i32, i32) {
    %c0_i32 = arith.constant 0 : i32
    %c0_i32_0 = arith.constant 0 : i32
    return %c0_i32, %arg0 : i32, i32
  }
  func.func @transform_1(%arg0: i32) -> (i32, i32) {
    %c0_i32 = arith.constant 0 : i32
    %c0_i32_0 = arith.constant 0 : i32
    return %c0_i32, %arg0 : i32, i32
  }
  func.func @transform_2(%arg0: i32) -> (i32, i32) {
    %c0_i32 = arith.constant 0 : i32
    %c0_i32_0 = arith.constant 0 : i32
    %c0_i32_1 = arith.constant 0 : i32
    return %c0_i32, %c0_i32_0 : i32, i32
  }
  func.func @transform_3(%arg0: i32) -> (i32, i32) {
    %c0_i32 = arith.constant 0 : i32
    %c0_i32_0 = arith.constant 0 : i32
    %c0_i32_1 = arith.constant 0 : i32
    return %c0_i32, %c0_i32_0 : i32, i32
  }
  func.func @transform_4(%arg0: i32) -> (i32, i32) {
    %c0_i32 = arith.constant 0 : i32
    %c0_i32_0 = arith.constant 0 : i32
    %c0_i32_1 = arith.constant 0 : i32
    return %c0_i32, %c0_i32_0 : i32, i32
  }
  func.func @transform_5(%arg0: i32) -> (i32, i32) {
    %c0_i32 = arith.constant 0 : i32
    %c0_i32_0 = arith.constant 0 : i32
    %c0_i32_1 = arith.constant 0 : i32
    return %c0_i32, %c0_i32_0 : i32, i32
  }
  func.func @transform_6(%arg0: i32) -> (i32, i32) {
    %c0_i32 = arith.constant 0 : i32
    %c0_i32_0 = arith.constant 0 : i32
    %c0_i32_1 = arith.constant 0 : i32
    return %c0_i32, %c0_i32_0 : i32, i32
  }
  func.func @transform_7(%arg0: i32) -> (i32, i32) {
    %c0_i32 = arith.constant 0 : i32
    %c0_i32_0 = arith.constant 0 : i32
    return %c0_i32, %arg0 : i32, i32
  }
}

module attributes {stable_mosaic.version = 11 : i64} {
  func.func @_output_kernel(%arg0: i32, %arg1: i32, %arg2: memref<1x4x256xf32, #tpu.memory_space<vmem>>, %arg3: memref<1x2x256xf32, #tpu.memory_space<vmem>>, %arg4: memref<4x4xf32, #tpu.memory_space<vmem>>, %arg5: memref<4x4xf32, #tpu.memory_space<vmem>>, %arg6: memref<4x1xf32, #tpu.memory_space<vmem>>, %arg7: memref<1x4x256xf32, #tpu.memory_space<vmem>>) attributes {dimension_semantics = [#tpu.dimension_semantics<parallel>, #tpu.dimension_semantics<parallel>], iteration_bounds = array<i64: 2, 1>, scalar_prefetch = 0 : i64, scratch_operands = 0 : i64, tpu.core_type = #tpu.core_type<tc>, window_params = [{transform_indices = @transform_0, window_bounds = array<i64: 1, 4, 256>}, {transform_indices = @transform_1, window_bounds = array<i64: 1, 2, 256>}, {pipeline_mode = #tpu.pipeline_mode<synchronous>, transform_indices = @transform_2, window_bounds = array<i64: 4, 4>}, {pipeline_mode = #tpu.pipeline_mode<synchronous>, transform_indices = @transform_3, window_bounds = array<i64: 4, 4>}, {pipeline_mode = #tpu.pipeline_mode<synchronous>, transform_indices = @transform_4, window_bounds = array<i64: 4, 1>}, {transform_indices = @transform_5, window_bounds = array<i64: 1, 4, 256>}]} {
    %c0 = arith.constant 0 : index
    %c0_0 = arith.constant 0 : index
    %c0_1 = arith.constant 0 : index
    %0 = vector.load %arg2[%c0, %c0_0, %c0_1] : memref<1x4x256xf32, #tpu.memory_space<vmem>>, vector<1x4x256xf32>
    %1 = vector.shape_cast %0 : vector<1x4x256xf32> to vector<4x256xf32>
    %c0_2 = arith.constant 0 : index
    %c0_3 = arith.constant 0 : index
    %c0_4 = arith.constant 0 : index
    %2 = vector.load %arg3[%c0_2, %c0_3, %c0_4] : memref<1x2x256xf32, #tpu.memory_space<vmem>>, vector<1x2x256xf32>
    %3 = vector.shape_cast %2 : vector<1x2x256xf32> to vector<2x256xf32>
    %c0_5 = arith.constant 0 : index
    %c0_6 = arith.constant 0 : index
    %4 = vector.load %arg4[%c0_5, %c0_6] : memref<4x4xf32, #tpu.memory_space<vmem>>, vector<4x4xf32>
    %5 = vector.extract_strided_slice %3 {offsets = [0, 0], sizes = [1, 256], strides = [1, 1]} : vector<2x256xf32> to vector<1x256xf32>
    %6 = vector.broadcast %5 : vector<1x256xf32> to vector<4x256xf32>
    %7 = arith.mulf %1, %6 : vector<4x256xf32>
    %cst = arith.constant dense<0.000000e+00> : vector<4x256xf32>
    %8 = tpu.matmul %4, %7, %cst {dimension_numbers = #tpu.dot_dimension_numbers<[1], [0], [0], [1], [0, 0, 1, 1], [], []>} : vector<4x4xf32>, vector<4x256xf32>, vector<4x256xf32> -> vector<4x256xf32>
    %c0_7 = arith.constant 0 : index
    %c0_8 = arith.constant 0 : index
    %9 = vector.load %arg5[%c0_7, %c0_8] : memref<4x4xf32, #tpu.memory_space<vmem>>, vector<4x4xf32>
    %10 = vector.extract_strided_slice %3 {offsets = [1, 0], sizes = [1, 256], strides = [1, 1]} : vector<2x256xf32> to vector<1x256xf32>
    %11 = vector.broadcast %10 : vector<1x256xf32> to vector<4x256xf32>
    %12 = arith.mulf %1, %11 : vector<4x256xf32>
    %cst_9 = arith.constant dense<0.000000e+00> : vector<4x256xf32>
    %13 = tpu.matmul %9, %12, %cst_9 {dimension_numbers = #tpu.dot_dimension_numbers<[1], [0], [0], [1], [0, 0, 1, 1], [], []>} : vector<4x4xf32>, vector<4x256xf32>, vector<4x256xf32> -> vector<4x256xf32>
    %14 = arith.addf %8, %13 : vector<4x256xf32>
    %c0_10 = arith.constant 0 : index
    %c0_11 = arith.constant 0 : index
    %15 = vector.load %arg6[%c0_10, %c0_11] : memref<4x1xf32, #tpu.memory_space<vmem>>, vector<4x1xf32>
    %16 = vector.broadcast %15 : vector<4x1xf32> to vector<4x256xf32>
    %17 = arith.addf %14, %16 : vector<4x256xf32>
    %cst_12 = arith.constant 0.000000e+00 : f32
    %18 = vector.broadcast %cst_12 : f32 to vector<4x256xf32>
    %19 = arith.maximumf %17, %18 : vector<4x256xf32>
    %c0_13 = arith.constant 0 : index
    %c0_14 = arith.constant 0 : index
    %c0_15 = arith.constant 0 : index
    %20 = vector.load %arg7[%c0_13, %c0_14, %c0_15] : memref<1x4x256xf32, #tpu.memory_space<vmem>>, vector<1x4x256xf32>
    %21 = vector.shape_cast %20 : vector<1x4x256xf32> to vector<4x256xf32>
    %22 = vector.shape_cast %19 : vector<4x256xf32> to vector<1x4x256xf32>
    tpu.vector_store %arg7[%c0_13, %c0_14, %c0_15], %22 {strides = array<i32>} : memref<1x4x256xf32, #tpu.memory_space<vmem>>, vector<1x4x256xf32>,
    return
  }
  func.func @transform_0(%arg0: i32, %arg1: i32) -> (i32, i32, i32) {
    %c0_i32 = arith.constant 0 : i32
    %c0_i32_0 = arith.constant 0 : i32
    return %arg0, %c0_i32, %arg1 : i32, i32, i32
  }
  func.func @transform_1(%arg0: i32, %arg1: i32) -> (i32, i32, i32) {
    %c0_i32 = arith.constant 0 : i32
    %c0_i32_0 = arith.constant 0 : i32
    return %arg0, %c0_i32, %arg1 : i32, i32, i32
  }
  func.func @transform_2(%arg0: i32, %arg1: i32) -> (i32, i32) {
    %c0_i32 = arith.constant 0 : i32
    %c0_i32_0 = arith.constant 0 : i32
    %c0_i32_1 = arith.constant 0 : i32
    return %c0_i32, %c0_i32_0 : i32, i32
  }
  func.func @transform_3(%arg0: i32, %arg1: i32) -> (i32, i32) {
    %c0_i32 = arith.constant 0 : i32
    %c0_i32_0 = arith.constant 0 : i32
    %c0_i32_1 = arith.constant 0 : i32
    return %c0_i32, %c0_i32_0 : i32, i32
  }
  func.func @transform_4(%arg0: i32, %arg1: i32) -> (i32, i32) {
    %c0_i32 = arith.constant 0 : i32
    %c0_i32_0 = arith.constant 0 : i32
    %c0_i32_1 = arith.constant 0 : i32
    return %c0_i32, %c0_i32_0 : i32, i32
  }
  func.func @transform_5(%arg0: i32, %arg1: i32) -> (i32, i32, i32) {
    %c0_i32 = arith.constant 0 : i32
    %c0_i32_0 = arith.constant 0 : i32
    return %arg0, %c0_i32, %arg1 : i32, i32, i32
  }
}

</mosaic_0001>

<llo_original>
// kernel: _lambda_.2
$region0: #{_lambda_.2}
  #allocation0 [shape = 'u32[]', space=smem, size = 0x4, offset = 0x4, fixed_abs, tag = 'smem constant byte address 0x4 - core index']
  #allocation1 [shape = 'u32[72,128]{1,0:T(1,128)}', space=vmem, size = 0x9000, scoped, tag = 'internal scratch']
  %s0 = inlined_call_operand.vmem [shape: bf16[16,128], index: 0, kind: input, shape index: {}]
  %s1 = inlined_call_operand.vmem [shape: bf16[8,128], index: 1, kind: input, shape index: {}]
  %s2 = inlined_call_operand.vmem [shape: bf16[8,16], index: 2, kind: input, shape index: {}]
  %s3 = inlined_call_operand.vmem [shape: bf16[8,8], index: 3, kind: input, shape index: {}]
  %s4 = inlined_call_operand.vmem [shape: f32[8,1], index: 4, kind: input, shape index: {}]
  %s5 = inlined_call_operand.vmem [shape: f32[2,8], index: 5, kind: input, shape index: {}]
  %s6 = inlined_call_operand.vmem [shape: f32[2,1], index: 6, kind: input, shape index: {}]
  %s7 = inlined_call_operand.vmem [shape: f32[2,128], index: 7, kind: output, shape index: {}]
  %s8 = sld [smem:[#allocation0]]
  $region38: #{_lambda_.2} parent=0
    _
  %s10 = ssub.s32 1, %s8
  %s11 = scalar_select 0, %s10, %s8
  // Predicated region
  $region2: #{_lambda_.2} parent=0 // pred_check
    _
  $region3: #{_lambda_.2} parent=0 // pred_check_branch
    %13 = sbr.rel (0) target = $region5
  $region4: #{_lambda_.2} parent=0 // pred_region
    _
  $region5: #{_lambda_.2} parent=0 // pred_fallthru
    _
  // Predicated region
  $region6: #{_lambda_.2} parent=0 // pred_check
    _
  $region7: #{_lambda_.2} parent=0 // pred_check_branch
    %15 = sbr.rel (0) target = $region9
  $region8: #{_lambda_.2} parent=0 // pred_region
    _
  $region9: #{_lambda_.2} parent=0 // pred_fallthru
    _
  // Predicated region
  $region10: #{_lambda_.2} parent=0 // pred_check
    _
  $region11: #{_lambda_.2} parent=0 // pred_check_branch
    %17 = sbr.rel (0) target = $region13
  $region12: #{_lambda_.2} parent=0 // pred_region
    _
  $region13: #{_lambda_.2} parent=0 // pred_fallthru
    _
  // Predicated region
  $region14: #{_lambda_.2} parent=0 // pred_check
    _
  $region15: #{_lambda_.2} parent=0 // pred_check_branch
    %19 = sbr.rel (0) target = $region17
  $region16: #{_lambda_.2} parent=0 // pred_region
    _
  $region17: #{_lambda_.2} parent=0 // pred_fallthru
    _
  // Predicated region
  $region18: #{_lambda_.2} parent=0 // pred_check
    _
  $region19: #{_lambda_.2} parent=0 // pred_check_branch
    %21 = sbr.rel (0) target = $region21
  $region20: #{_lambda_.2} parent=0 // pred_region
    _
  $region21: #{_lambda_.2} parent=0 // pred_fallthru
    _
  // Predicated region
  $region22: #{_lambda_.2} parent=0 // pred_check
    _
  $region23: #{_lambda_.2} parent=0 // pred_check_branch
    %23 = sbr.rel (0) target = $region25
  $region24: #{_lambda_.2} parent=0 // pred_region
    _
  $region25: #{_lambda_.2} parent=0 // pred_fallthru
    _
  // Predicated region
  $region26: #{_lambda_.2} parent=0 // pred_check
    _
  $region27: #{_lambda_.2} parent=0 // pred_check_branch
    %25 = sbr.rel (0) target = $region29
  $region28: #{_lambda_.2} parent=0 // pred_region
    _
  $region29: #{_lambda_.2} parent=0 // pred_fallthru
    _
  %v27 = vld [vmem:[%s2] sm:$0xf]
  %v28 = vld [vmem:[%s0] sm:$0xf]
  %v29 = vld [vmem:[%s0 + $0x4] sm:$0xf]
  %v30 = vld [vmem:[%s3] sm:$0xf]
  %v31 = vld [vmem:[%s1] sm:$0xf]
  %v32 = vld [vmem:[%s4] sm:$0xff]
  %34 = vset.pattern.permute.xlu0 0
  %35 = vperm.xlu0 %34, %v32
  %v36 = vpop.permute.xlu0 %35
  %vm38 = vcmask 64512
  %v40 = vsel %vm38, %v30, 0
  %vm42 = vcmask 1043456
  %v44 = vsel %vm42, %v31, 0
  %46 = vmatpush.bf16.msra.mxu0 0
  %47 = vmatpush.bf16.msra.mxu0 0
  %48 = vmatpush.bf16.msra.mxu0 0
  %49 = vmatpush.bf16.msra.mxu0 0
  %50 = vmatpush.bf16.msra.mxu0 0
  %51 = vmatpush.bf16.msra.mxu0 0
  %52 = vmatpush.bf16.msra.mxu0 0
  %53 = vmatpush.bf16.msra.mxu0 %v44
  %54 = vmatmul.bf16.gmra.mxu0 %v40
  %v55 = vpop.f32.mrf.mxu0
  %v56 = vadd.f32 %v36, %v55
  %v57 = vpop.f32.mrf.mxu0
  %58 = vdwg.mxu0
  %v61 = vunpack.c.l.b16 %v28
  %v62 = vunpack.c.l.b16 %v29
  %v63 = vpack.c.b16 %v62, %v61
  %vm65 = vcmask 130048
  %v67 = vsel %vm65, %v27, 0
  %69 = vmatpush.bf16.msra.mxu0 0
  %70 = vmatpush.bf16.msra.mxu0 0
  %71 = vmatpush.bf16.msra.mxu0 0
  %72 = vmatpush.bf16.msra.mxu0 0
  %73 = vmatpush.bf16.msra.mxu0 0
  %74 = vmatpush.bf16.msra.mxu0 0
  %75 = vmatpush.bf16.msra.mxu0 0
  %76 = vmatpush.bf16.msra.mxu0 %v63
  %77 = vmatmul.bf16.gmra.mxu0 %v67
  %v78 = vpop.f32.mrf.mxu0
  %v79 = vadd.f32 %v56, %v78
  %v80 = vpop.f32.mrf.mxu0
  %81 = vdwg.mxu0
  %v82 = vmax.f32 %v79, 0.0
  %v83 = vld [vmem:[%s5] sm:$0x3]
  %v84 = vld [vmem:[%s6] sm:$0x3]
  %86 = vset.pattern.permute.xlu0 0
  %87 = vperm.xlu0 %86, %v84
  %v88 = vpop.permute.xlu0 %87
  %v91 = vsel %vm38, %v83, 0
  %93 = vmatpush.msra.mxu0 0.0
  %94 = vmatpush.msra.mxu0 0.0
  %95 = vmatpush.msra.mxu0 0.0
  %96 = vmatpush.msra.mxu0 0.0
  %97 = vmatpush.msra.mxu0 0.0
  %98 = vmatpush.msra.mxu0 0.0
  %99 = vmatpush.msra.mxu0 0.0
  %100 = vmatpush.msra.mxu0 0.0
  %101 = vmatpush.msra.mxu0 0.0
  %102 = vmatpush.msra.mxu0 0.0
  %103 = vmatpush.msra.mxu0 0.0
  %104 = vmatpush.msra.mxu0 0.0
  %105 = vmatpush.msra.mxu0 0.0
  %106 = vmatpush.msra.mxu0 0.0
  %107 = vmatpush.msra.mxu0 0.0
  %108 = vmatpush.msra.mxu0 %v82
  %109 = vmatmul.f32.gmra.mxu0 %v91
  %v110 = vpop.f32.mrf.mxu0
  %v111 = vadd.f32 %v88, %v110
  %112 = vdwg.mxu0
  %v113 = vxor.u32 %v111, 2147483648
  %v114 = vmul.f32 %v113, 1.442695
  %v115 = vpow.pop %v114
  %v116 = vadd.f32 %v115, 1.0
  %v117 = vrcp.pop %v116
  %v118 = vmul.f32 %v116, %v117
  %v119 = vsub.f32 1.0, %v118
  %v120 = vmul.f32 %v117, %v119
  %v121 = vadd.f32 %v117, %v120
  %vm122 = vweird.f32 %v116
  %vm123 = vweird.f32 %v117
  %vm124 = vmor %vm122, %vm123
  %v125 = vsel %vm124, %v117, %v121
  %v126 = vand.u32 2147483647, %v116
  %vm127 = vcmp.eq.f32.partialorder %v126, 8.507059e+37
  %v128 = vand.u32 %v116, 2147483648
  %v129 = vor.u32 1.1754944e-38, %v128
  %v130 = vsel %vm127, %v129, %v125
  %v131 = vmul.f32 1.0, %v130
  %132 = vst [vmem:[%s7] sm:$0x3] %v131
  // Predicated region
  $region30: #{_lambda_.2} parent=0 // pred_check
    _
  $region31: #{_lambda_.2} parent=0 // pred_check_branch
    %134 = sbr.rel (0) target = $region33
  $region32: #{_lambda_.2} parent=0 // pred_region
    _
  $region33: #{_lambda_.2} parent=0 // pred_fallthru
    _
  // Predicated region
  $region34: #{_lambda_.2} parent=0 // pred_check
    _
  $region35: #{_lambda_.2} parent=0 // pred_check_branch
    %136 = sbr.rel (0) target = $region37
  $region36: #{_lambda_.2} parent=0 // pred_region
    _
  $region37: #{_lambda_.2} parent=0 // pred_fallthru
    _

// kernel: _lambda_.3
$region0: #{_lambda_.3}
  #allocation0 [shape = 'u32[]', space=smem, size = 0x4, offset = 0x4, fixed_abs, tag = 'smem constant byte address 0x4 - core index']
  #allocation1 [shape = 'u32[72,128]{1,0:T(1,128)}', space=vmem, size = 0x9000, scoped, tag = 'internal scratch']
  %s0 = inlined_call_operand.vmem [shape: f32[2,4,256], index: 0, kind: input, shape index: {}]
  %s1 = inlined_call_operand.vmem [shape: f32[2,2,256], index: 1, kind: input, shape index: {}]
  %s2 = inlined_call_operand.vmem [shape: f32[4,4], index: 2, kind: input, shape index: {}]
  %s3 = inlined_call_operand.vmem [shape: f32[4,4], index: 3, kind: input, shape index: {}]
  %s4 = inlined_call_operand.vmem [shape: f32[4,1], index: 4, kind: input, shape index: {}]
  %s5 = inlined_call_operand.vmem [shape: f32[2,4,256], index: 5, kind: output, shape index: {}]
  %s6 = sld [smem:[#allocation0]]
  $region53: #{_lambda_.3} parent=0
    _
  %s8 = ssub.s32 1, %s6
  %s9 = scalar_select 0, %s8, %s6
  loop: start=0, step=1, limit=4
  $region2: #{_lambda_.3} parent=0 // loop_pre_header
    _
  $region3: #{_lambda_.3} parent=0 // loop_header
    %s11 = sphi 0, %s15
    %p12 = scmp.ge.s32.totalorder %s11, 4
    %s18 = sphi 0, %s30
    %s19 = sphi 0, %s26
    %s20 = sphi 0, %s18
    %s21 = sphi 0, %s19
    %s22 = sphi 0, %s20
    %s23 = sphi 0, %s21
    %s35 = sphi 0, %s37
    %s38 = sphi 0, %s35
    %s39 = sphi 0, %s38
    %s55 = sphi 0, %s39
    %s63 = sphi 0, %s65
    %s66 = sphi 0, %s63
    %s67 = sphi 0, %s66
    %s83 = sphi 0, %s67
    %s87 = sphi 0, %s87
    %s89 = sphi 0, %s87
    %s90 = sphi 0, %s89
    %s104 = sphi 0, %s90
    %s108 = sphi 0, %s108
    %s110 = sphi 0, %s108
    %s111 = sphi 0, %s110
    %s125 = sphi 0, %s111
    %s129 = sphi 0, %s129
    %s131 = sphi 0, %s129
    %s132 = sphi 0, %s131
    %s146 = sphi 0, %s132
    %s154 = sphi 0, %s156
    %s157 = sphi 0, %s154
    %s158 = sphi 0, %s157
    %s174 = sphi 0, %s158
  $region4: #{_lambda_.3} parent=0 // loop_header_branch
    %14 = sbr.rel (%p12) target = $region8
  $region5: #{_lambda_.3} parent=0 // loop_body
    %s16 = ssub.s32 %s11, 1
    %s17 = ssub.s32 %s11, 2
    %s24 = sadd.s32 1, %s19
    %p25 = scmp.ge.s32.totalorder %s24, 1
    %s26 = scalar_select %p25, 0, %s24
    %s27 = sadd.s32 1, %s18
    %s28 = scalar_select %p25, %s27, %s18
    %p29 = scmp.ge.s32.totalorder %s28, 2
    %s30 = scalar_select %p29, 0, %s28
    %s31 = ssub.s32 %s18, %s30
    %s32 = ssub.s32 %s19, %s26
    %s33 = sor.u32 %s31, %s32
    %p34 = scmp.eq.s32.totalorder %s33, 0
    %s36 = sadd.s32 %s35, 1
    %s37 = scalar_select %p34, %s35, %s36
    %p40 = pneg %p34
    %p41 = scmp.eq.s32.totalorder %s11, 1
    %p42 = por %p40, %p41
    %p43 = scmp.ne.s32.totalorder %s35, %s38
    %p44 = scmp.eq.s32.totalorder %s11, 0
    %p45 = por %p43, %p44
    %p46 = scmp.ne.s32.totalorder %s35, %s38
    %p47 = scmp.eq.s32.totalorder %s16, 1
    %p48 = por %p46, %p47
    %p49 = scmp.ne.s32.totalorder %s38, %s39
    %p50 = scmp.eq.s32.totalorder %s16, 0
    %p51 = por %p49, %p50
    %p52 = scmp.ne.s32.totalorder %s38, %s39
    %p53 = scmp.eq.s32.totalorder %s17, 1
    %p54 = por %p52, %p53
    %p56 = scmp.ne.s32.totalorder %s39, %s55
    %p57 = scmp.eq.s32.totalorder %s17, 0
    %p58 = por %p56, %p57
    %s59 = ssub.s32 %s18, %s30
    %s60 = ssub.s32 %s19, %s26
    %s61 = sor.u32 %s59, %s60
    %p62 = scmp.eq.s32.totalorder %s61, 0
    %s64 = sadd.s32 %s63, 1
    %s65 = scalar_select %p62, %s63, %s64
    %p68 = pneg %p62
    %p69 = scmp.eq.s32.totalorder %s11, 1
    %p70 = por %p68, %p69
    %p71 = scmp.ne.s32.totalorder %s63, %s66
    %p72 = scmp.eq.s32.totalorder %s11, 0
    %p73 = por %p71, %p72
    %p74 = scmp.ne.s32.totalorder %s63, %s66
    %p75 = scmp.eq.s32.totalorder %s16, 1
    %p76 = por %p74, %p75
    %p77 = scmp.ne.s32.totalorder %s66, %s67
    %p78 = scmp.eq.s32.totalorder %s16, 0
    %p79 = por %p77, %p78
    %p80 = scmp.ne.s32.totalorder %s66, %s67
    %p81 = scmp.eq.s32.totalorder %s17, 1
    %p82 = por %p80, %p81
    %p84 = scmp.ne.s32.totalorder %s67, %s83
    %p85 = scmp.eq.s32.totalorder %s17, 0
    %p86 = por %p84, %p85
    %s88 = sadd.s32 %s87, 1
    %p91 = scmp.eq.s32.totalorder %s11, 1
    %p92 = scmp.ne.s32.totalorder %s87, %s89
    %p93 = scmp.eq.s32.totalorder %s11, 0
    %p94 = por %p92, %p93
    %p95 = scmp.ne.s32.totalorder %s87, %s89
    %p96 = scmp.eq.s32.totalorder %s16, 1
    %p97 = por %p95, %p96
    %p98 = scmp.ne.s32.totalorder %s89, %s90
    %p99 = scmp.eq.s32.totalorder %s16, 0
    %p100 = por %p98, %p99
    %p101 = scmp.ne.s32.totalorder %s89, %s90
    %p102 = scmp.eq.s32.totalorder %s17, 1
    %p103 = por %p101, %p102
    %p105 = scmp.ne.s32.totalorder %s90, %s104
    %p106 = scmp.eq.s32.totalorder %s17, 0
    %p107 = por %p105, %p106
    %s109 = sadd.s32 %s108, 1
    %p112 = scmp.eq.s32.totalorder %s11, 1
    %p113 = scmp.ne.s32.totalorder %s108, %s110
    %p114 = scmp.eq.s32.totalorder %s11, 0
    %p115 = por %p113, %p114
    %p116 = scmp.ne.s32.totalorder %s108, %s110
    %p117 = scmp.eq.s32.totalorder %s16, 1
    %p118 = por %p116, %p117
    %p119 = scmp.ne.s32.totalorder %s110, %s111
    %p120 = scmp.eq.s32.totalorder %s16, 0
    %p121 = por %p119, %p120
    %p122 = scmp.ne.s32.totalorder %s110, %s111
    %p123 = scmp.eq.s32.totalorder %s17, 1
    %p124 = por %p122, %p123
    %p126 = scmp.ne.s32.totalorder %s111, %s125
    %p127 = scmp.eq.s32.totalorder %s17, 0
    %p128 = por %p126, %p127
    %s130 = sadd.s32 %s129, 1
    %p133 = scmp.eq.s32.totalorder %s11, 1
    %p134 = scmp.ne.s32.totalorder %s129, %s131
    %p135 = scmp.eq.s32.totalorder %s11, 0
    %p136 = por %p134, %p135
    %p137 = scmp.ne.s32.totalorder %s129, %s131
    %p138 = scmp.eq.s32.totalorder %s16, 1
    %p139 = por %p137, %p138
    %p140 = scmp.ne.s32.totalorder %s131, %s132
    %p141 = scmp.eq.s32.totalorder %s16, 0
    %p142 = por %p140, %p141
    %p143 = scmp.ne.s32.totalorder %s131, %s132
    %p144 = scmp.eq.s32.totalorder %s17, 1
    %p145 = por %p143, %p144
    %p147 = scmp.ne.s32.totalorder %s132, %s146
    %p148 = scmp.eq.s32.totalorder %s17, 0
    %p149 = por %p147, %p148
    %s150 = ssub.s32 %s18, %s30
    %s151 = ssub.s32 %s19, %s26
    %s152 = sor.u32 %s150, %s151
    %p153 = scmp.eq.s32.totalorder %s152, 0
    %s155 = sadd.s32 %s154, 1
    %s156 = scalar_select %p153, %s154, %s155
    %p159 = pneg %p153
    %p160 = scmp.eq.s32.totalorder %s11, 1
    %p161 = por %p159, %p160
    %p162 = scmp.ne.s32.totalorder %s154, %s157
    %p163 = scmp.eq.s32.totalorder %s11, 0
    %p164 = por %p162, %p163
    %p165 = scmp.ne.s32.totalorder %s154, %s157
    %p166 = scmp.eq.s32.totalorder %s16, 1
    %p167 = por %p165, %p166
    %p168 = scmp.ne.s32.totalorder %s157, %s158
    %p169 = scmp.eq.s32.totalorder %s16, 0
    %p170 = por %p168, %p169
    %p171 = scmp.ne.s32.totalorder %s157, %s158
    %p172 = scmp.eq.s32.totalorder %s17, 1
    %p173 = por %p171, %p172
    %p175 = scmp.ne.s32.totalorder %s158, %s174
    %p176 = scmp.eq.s32.totalorder %s17, 0
    %p177 = por %p175, %p176
    %p178 = scmp.le.s32.totalorder 1, %s11
    %p179 = scmp.lt.s32.totalorder %s11, 3
    %p180 = pnand %p178, %p179
    %p181 = pneg %p180
    // Predicated region
    $region9: #{_lambda_.3} parent=5 // pred_check
      _
    $region10: #{_lambda_.3} parent=5 // pred_check_branch
      %183 = sbr.rel (%p180) target = $region12
    $region11: #{_lambda_.3} parent=5 // pred_region
      %s184 = ssub.s32 %s11, 1
      // Predicated region
      $region13: #{_lambda_.3} parent=11 // pred_check
        %p185 = pneg %p100
      $region14: #{_lambda_.3} parent=11 // pred_check_branch
        %187 = sbr.rel (%p185) target = $region16
      $region15: #{_lambda_.3} parent=11 // pred_region
        _
      $region16: #{_lambda_.3} parent=11 // pred_fallthru
        _
      // Predicated region
      $region17: #{_lambda_.3} parent=11 // pred_check
        %p188 = pneg %p121
      $region18: #{_lambda_.3} parent=11 // pred_check_branch
        %190 = sbr.rel (%p188) target = $region20
      $region19: #{_lambda_.3} parent=11 // pred_region
        _
      $region20: #{_lambda_.3} parent=11 // pred_fallthru
        _
      // Predicated region
      $region21: #{_lambda_.3} parent=11 // pred_check
        %p191 = pneg %p142
      $region22: #{_lambda_.3} parent=11 // pred_check_branch
        %193 = sbr.rel (%p191) target = $region24
      $region23: #{_lambda_.3} parent=11 // pred_region
        _
      $region24: #{_lambda_.3} parent=11 // pred_fallthru
        _
    $region12: #{_lambda_.3} parent=5 // pred_fallthru
      _
    %p194 = scmp.lt.s32.totalorder %s11, 2
    // Predicated region
    $region25: #{_lambda_.3} parent=5 // pred_check
      %p195 = pneg %p194
    $region26: #{_lambda_.3} parent=5 // pred_check_branch
      %197 = sbr.rel (%p195) target = $region28
    $region27: #{_lambda_.3} parent=5 // pred_region
      // Predicated region
      $region29: #{_lambda_.3} parent=27 // pred_check
        %p198 = pneg %p45
      $region30: #{_lambda_.3} parent=27 // pred_check_branch
        %200 = sbr.rel (%p198) target = $region32
      $region31: #{_lambda_.3} parent=27 // pred_region
        %s201 = smul.u32 2, %s19
        %p202 = scmp.lt.s32.totalorder %s18, 1
        %s203 = scalar_select %p202, %s18, 1
        %p204 = scmp.lt.s32.totalorder %s201, 1
        %s205 = scalar_select %p204, %s201, 1
        %s206 = smul.addr %s203, 2
        %s207 = sadd.s32 %s205, %s206
        %s208 = smul.addr %s207, 4
        %s209 = scalar_lea.vmem %s0, %s208
        %s210 = smul.u32 2, %s19
      $region32: #{_lambda_.3} parent=27 // pred_fallthru
        _
      // Predicated region
      $region33: #{_lambda_.3} parent=27 // pred_check
        %p211 = pneg %p73
      $region34: #{_lambda_.3} parent=27 // pred_check_branch
        %213 = sbr.rel (%p211) target = $region36
      $region35: #{_lambda_.3} parent=27 // pred_region
        %s214 = smul.u32 2, %s19
        %p215 = scmp.lt.s32.totalorder %s18, 1
        %s216 = scalar_select %p215, %s18, 1
        %p217 = scmp.lt.s32.totalorder %s214, 1
        %s218 = scalar_select %p217, %s214, 1
        %s219 = smul.addr %s216, 2
        %s220 = sadd.s32 %s218, %s219
        %s221 = smul.addr %s220, 2
        %s222 = scalar_lea.vmem %s1, %s221
        %s223 = smul.u32 2, %s19
      $region36: #{_lambda_.3} parent=27 // pred_fallthru
        _
    $region28: #{_lambda_.3} parent=5 // pred_fallthru
      _
    %p224 = scmp.le.s32.totalorder 1, %s11
    %p225 = scmp.lt.s32.totalorder %s11, 3
    %p226 = pnand %p224, %p225
    %p227 = pneg %p226
    // Predicated region
    $region37: #{_lambda_.3} parent=5 // pred_check
      _
    $region38: #{_lambda_.3} parent=5 // pred_check_branch
      %229 = sbr.rel (%p226) target = $region40
    $region39: #{_lambda_.3} parent=5 // pred_region
      %s230 = ssub.s32 %s11, 1
      %s231 = smul.u32 2, %s21
      %p232 = scmp.lt.s32.totalorder %s20, 1
      %s233 = scalar_select %p232, %s20, 1
      %p234 = scmp.lt.s32.totalorder %s231, 1
      %s235 = scalar_select %p234, %s231, 1
      %s236 = smul.addr %s233, 2
      %s237 = sadd.s32 %s235, %s236
      %s238 = smul.addr %s237, 4
      %s239 = scalar_lea.vmem %s0, %s238
      %p240 = pneg %p51
      %p241 = pneg %p48
      %s242 = smul.u32 2, %s21
      %p243 = scmp.lt.s32.totalorder %s20, 1
      %s244 = scalar_select %p243, %s20, 1
      %p245 = scmp.lt.s32.totalorder %s242, 1
      %s246 = scalar_select %p245, %s242, 1
      %s247 = smul.addr %s244, 2
      %s248 = sadd.s32 %s246, %s247
      %s249 = smul.addr %s248, 2
      %s250 = scalar_lea.vmem %s1, %s249
      %p251 = pneg %p79
      %p252 = pneg %p76
      %p253 = pneg %p100
      %p254 = pneg %p97
      %p255 = pneg %p121
      %p256 = pneg %p118
      %p257 = pneg %p142
      %p258 = pneg %p139
      %p259 = pneg %p170
      %p260 = pneg %p167
      %s261 = smul.u32 2, %s21
      %p262 = scmp.lt.s32.totalorder %s20, 1
      %s263 = scalar_select %p262, %s20, 1
      %p264 = scmp.lt.s32.totalorder %s261, 1
      %s265 = scalar_select %p264, %s261, 1
      %s266 = smul.addr %s263, 2
      %s267 = sadd.s32 %s265, %s266
      %s268 = smul.addr %s267, 4
      %s269 = scalar_lea.vmem %s5, %s268
      %s270 = smul.u32 2, %s21
      %p271 = scmp.lt.s32.totalorder %s20, 1
      %s272 = scalar_select %p271, %s20, 1
      %p273 = scmp.lt.s32.totalorder %s270, 1
      %s274 = scalar_select %p273, %s270, 1
      %s275 = smul.addr %s272, 2
      %s276 = sadd.s32 %s274, %s275
      %s277 = smul.addr %s276, 4
      %s278 = scalar_lea.vmem %s0, %s277
      %s279 = smul.u32 2, %s21
      %s280 = smul.u32 2, %s21
      %p281 = scmp.lt.s32.totalorder %s20, 1
      %s282 = scalar_select %p281, %s20, 1
      %p283 = scmp.lt.s32.totalorder %s280, 1
      %s284 = scalar_select %p283, %s280, 1
      %s285 = smul.addr %s282, 2
      %s286 = sadd.s32 %s284, %s285
      %s287 = smul.addr %s286, 2
      %s288 = scalar_lea.vmem %s1, %s287
      %s289 = smul.u32 2, %s21
      %s290 = smul.u32 2, %s21
      %p291 = scmp.lt.s32.totalorder %s20, 1
      %s292 = scalar_select %p291, %s20, 1
      %p293 = scmp.lt.s32.totalorder %s290, 1
      %s294 = scalar_select %p293, %s290, 1
      %s295 = smul.addr %s292, 2
      %s296 = sadd.s32 %s294, %s295
      %s297 = smul.addr %s296, 4
      %s298 = scalar_lea.vmem %s5, %s297
      %s299 = smul.u32 2, %s21
      %v300 = vld [vmem:[%s278] sm:$0xff]
      %v301 = vld [vmem:[%s288] sm:$0xf]
      %v302 = vld [vmem:[%s2] sm:$0xf]
      %v304 = vperm.slane %v301, 0
      %v305 = vperm.slane %v301, 2
      %v308 = vperm.slane %v304, 0
      %v309 = vperm.slane %v305, 0
      %v312 = vrot.slane %v309, 4
      %vm313 = vcmask 1043456
      %v314 = vsel %vm313, %v308, %v312
      %v316 = vmul.f32 %v300, %v314
      %v317 = vld [vmem:[%s3] sm:$0xf]
      %v318 = vperm.slane %v301, 1
      %v319 = vperm.slane %v301, 3
      %v322 = vperm.slane %v318, 1
      %v323 = vperm.slane %v319, 1
      %v326 = vrot.slane %v323, 4
      %v327 = vsel %vm313, %v322, %v326
      %v329 = vmul.f32 %v300, %v327
      %331 = vst [vmem:[#allocation1] ss:$2 sm:$0xff] %v329
      %v332 = vld.sshfl [vmem:[#allocation1] sm:$0xff pattern:$0x75316420]
      %v333 = vld.sshfl [vmem:[#allocation1 + $0x8] sm:$0xff pattern:$0x75316420]
      %vm334 = vcmask 31744
      %v336 = vsel %vm334, %v317, 0
      %v338 = vsel %vm313, %v332, 0
      %v340 = vsel %vm313, %v333, 0
      %342 = vmatpush.msra.mxu0 0.0
      %343 = vmatpush.msra.mxu0 0.0
      %344 = vmatpush.msra.mxu0 0.0
      %345 = vmatpush.msra.mxu0 0.0
      %346 = vmatpush.msra.mxu0 0.0
      %347 = vmatpush.msra.mxu0 0.0
      %348 = vmatpush.msra.mxu0 0.0
      %349 = vmatpush.msra.mxu0 0.0
      %350 = vmatpush.msra.mxu0 0.0
      %351 = vmatpush.msra.mxu0 0.0
      %352 = vmatpush.msra.mxu0 0.0
      %353 = vmatpush.msra.mxu0 0.0
      %354 = vmatpush.msra.mxu0 0.0
      %355 = vmatpush.msra.mxu0 0.0
      %356 = vmatpush.msra.mxu0 0.0
      %357 = vmatpush.msra.mxu0 %v338
      %358 = vmatmul.f32.gmra.mxu0 %v336
      %v359 = vpop.f32.mrf.mxu0
      %v360 = vadd.f32 0.0, %v359
      %361 = vdwg.mxu0
      %362 = vmatpush.msra.mxu0 0.0
      %363 = vmatpush.msra.mxu0 0.0
      %364 = vmatpush.msra.mxu0 0.0
      %365 = vmatpush.msra.mxu0 0.0
      %366 = vmatpush.msra.mxu0 0.0
      %367 = vmatpush.msra.mxu0 0.0
      %368 = vmatpush.msra.mxu0 0.0
      %369 = vmatpush.msra.mxu0 0.0
      %370 = vmatpush.msra.mxu0 0.0
      %371 = vmatpush.msra.mxu0 0.0
      %372 = vmatpush.msra.mxu0 0.0
      %373 = vmatpush.msra.mxu0 0.0
      %374 = vmatpush.msra.mxu0 0.0
      %375 = vmatpush.msra.mxu0 0.0
      %376 = vmatpush.msra.mxu0 0.0
      %377 = vmatpush.msra.mxu0 %v340
      %378 = vmatmul.f32.gmra.mxu0 %v336
      %v379 = vpop.f32.mrf.mxu0
      %v380 = vadd.f32 0.0, %v379
      %381 = vdwg.mxu0
      %383 = vst [vmem:[#allocation1] ss:$2 sm:$0xff] %v316
      %v384 = vld.sshfl [vmem:[#allocation1] sm:$0xff pattern:$0x75316420]
      %v385 = vld.sshfl [vmem:[#allocation1 + $0x8] sm:$0xff pattern:$0x75316420]
      %v387 = vsel %vm334, %v302, 0
      %v389 = vsel %vm313, %v384, 0
      %v391 = vsel %vm313, %v385, 0
      %393 = vmatpush.msra.mxu0 0.0
      %394 = vmatpush.msra.mxu0 0.0
      %395 = vmatpush.msra.mxu0 0.0
      %396 = vmatpush.msra.mxu0 0.0
      %397 = vmatpush.msra.mxu0 0.0
      %398 = vmatpush.msra.mxu0 0.0
      %399 = vmatpush.msra.mxu0 0.0
      %400 = vmatpush.msra.mxu0 0.0
      %401 = vmatpush.msra.mxu0 0.0
      %402 = vmatpush.msra.mxu0 0.0
      %403 = vmatpush.msra.mxu0 0.0
      %404 = vmatpush.msra.mxu0 0.0
      %405 = vmatpush.msra.mxu0 0.0
      %406 = vmatpush.msra.mxu0 0.0
      %407 = vmatpush.msra.mxu0 0.0
      %408 = vmatpush.msra.mxu0 %v389
      %409 = vmatmul.f32.gmra.mxu0 %v387
      %v410 = vpop.f32.mrf.mxu0
      %v411 = vadd.f32 %v360, %v410
      %412 = vdwg.mxu0
      %413 = vmatpush.msra.mxu0 0.0
      %414 = vmatpush.msra.mxu0 0.0
      %415 = vmatpush.msra.mxu0 0.0
      %416 = vmatpush.msra.mxu0 0.0
      %417 = vmatpush.msra.mxu0 0.0
      %418 = vmatpush.msra.mxu0 0.0
      %419 = vmatpush.msra.mxu0 0.0
      %420 = vmatpush.msra.mxu0 0.0
      %421 = vmatpush.msra.mxu0 0.0
      %422 = vmatpush.msra.mxu0 0.0
      %423 = vmatpush.msra.mxu0 0.0
      %424 = vmatpush.msra.mxu0 0.0
      %425 = vmatpush.msra.mxu0 0.0
      %426 = vmatpush.msra.mxu0 0.0
      %427 = vmatpush.msra.mxu0 0.0
      %428 = vmatpush.msra.mxu0 %v391
      %429 = vmatmul.f32.gmra.mxu0 %v387
      %v430 = vpop.f32.mrf.mxu0
      %v431 = vadd.f32 %v380, %v430
      %432 = vdwg.mxu0
      %v433 = vld [vmem:[%s4] sm:$0xf]
      %435 = vset.pattern.permute.xlu0 0
      %436 = vperm.xlu0 %435, %v433
      %v437 = vpop.permute.xlu0 %436
      %v439 = vadd.f32 %v411, %v437
      %v440 = vadd.f32 %v431, %v437
      %v441 = vmax.f32 %v439, 0.0
      %v442 = vmax.f32 %v440, 0.0
      %v445 = vrot.slane %v442, 4
      %v446 = vsel %vm313, %v441, %v445
      %448 = vst [vmem:[%s298] sm:$0xff] %v446
      %s449 = smul.u32 2, %s21
      %p450 = scmp.lt.s32.totalorder %s20, 1
      %s451 = scalar_select %p450, %s20, 1
      %p452 = scmp.lt.s32.totalorder %s449, 1
      %s453 = scalar_select %p452, %s449, 1
      %s454 = smul.addr %s451, 2
      %s455 = sadd.s32 %s453, %s454
      %s456 = smul.addr %s455, 4
      %s457 = scalar_lea.vmem %s5, %s456
      // Predicated region
      $region41: #{_lambda_.3} parent=39 // pred_check
        %p458 = pneg %p167
      $region42: #{_lambda_.3} parent=39 // pred_check_branch
        %460 = sbr.rel (%p458) target = $region44
      $region43: #{_lambda_.3} parent=39 // pred_region
        %s461 = smul.u32 2, %s21
      $region44: #{_lambda_.3} parent=39 // pred_fallthru
        _
    $region40: #{_lambda_.3} parent=5 // pred_fallthru
      _
    %p462 = scmp.le.s32.totalorder 2, %s11
    // Predicated region
    $region45: #{_lambda_.3} parent=5 // pred_check
      %p463 = pneg %p462
    $region46: #{_lambda_.3} parent=5 // pred_check_branch
      %465 = sbr.rel (%p463) target = $region48
    $region47: #{_lambda_.3} parent=5 // pred_region
      %s466 = ssub.s32 %s11, 2
      // Predicated region
      $region49: #{_lambda_.3} parent=47 // pred_check
        %p467 = pneg %p173
      $region50: #{_lambda_.3} parent=47 // pred_check_branch
        %469 = sbr.rel (%p467) target = $region52
      $region51: #{_lambda_.3} parent=47 // pred_region
        %s470 = smul.u32 2, %s23
        %p471 = scmp.lt.s32.totalorder %s22, 1
        %s472 = scalar_select %p471, %s22, 1
        %p473 = scmp.lt.s32.totalorder %s470, 1
        %s474 = scalar_select %p473, %s470, 1
        %s475 = smul.addr %s472, 2
        %s476 = sadd.s32 %s474, %s475
        %s477 = smul.addr %s476, 4
        %s478 = scalar_lea.vmem %s5, %s477
      $region52: #{_lambda_.3} parent=47 // pred_fallthru
        _
    $region48: #{_lambda_.3} parent=5 // pred_fallthru
      _
  $region6: #{_lambda_.3} parent=0 // loop_footer
    %s15 = sadd.s32 1, %s11
  $region7: #{_lambda_.3} parent=0 // loop_footer_branch
    %10 = sbr.rel target = $region3
  $region8: #{_lambda_.3} parent=0 // loop_exit
    _

</llo_original>
